<compile_context>
chip_gen: v6e
topology: v6e:2x2x1
jax: 0.10.0
libtpu: 0.0.40
codegen_flags: <defaults>
</compile_context>

<pallas_src>
import functools
import math

import jax
import jax.numpy as jnp
from jax.experimental import pallas as pl
from jax.experimental.pallas import tpu as pltpu


def _round_up(v, m):
    return ((v + m - 1) // m) * m


def _cdiv(a, b):
    return -(-a // b)


def _vmem_capacity_bytes(default=64 << 20):
    """Best-effort VMEM capacity query; conservative 64 MiB fallback."""
    try:
        info = pltpu.get_tpu_info()
        cap = getattr(info, "vmem_capacity_bytes", None)
        if cap:
            return int(cap)
    except Exception:
        pass
    return default


def _regdice_mse_kernel(x_ref, y_ref, inter_ref, card_ref, mse_ref, *,
                        spatial, tile_s, s_inner, any_mask):
    """One grid step: a (tr, ts) slab of logits x and targets y.

    Grid = (row_tiles, P, s_inner); axes 0 and 1 are parallel, axis 2 is the
    spatial reduction (arbitrary).  Per-row partial sums accumulate directly
    into the (tr, 1) output blocks, which are resident across axis 2 only.
    """
    p = pl.program_id(1)
    s = pl.program_id(2)

    @pl.when(s == 0)
    def _():
        inter_ref[...] = jnp.zeros_like(inter_ref)
        card_ref[...] = jnp.zeros_like(card_ref)
        mse_ref[...] = jnp.zeros_like(mse_ref)

    logits = x_ref[...].astype(jnp.float32)
    y = y_ref[...].astype(jnp.float32)
    # sigmoid(x) = 0.5*tanh(0.5*x)+0.5: one EUP op, no full-precision VPU divide.
    x = 0.5 * jnp.tanh(0.5 * logits) + 0.5
    diff = x - y
    inter_c = (1.0 - jnp.abs(diff)) * jnp.minimum(y, x)
    card_c = x + y
    mse_c = diff * diff

    def accumulate(ic, cc, mc):
        inter_ref[...] += jnp.sum(ic, axis=-1, keepdims=True)
        card_ref[...] += jnp.sum(cc, axis=-1, keepdims=True)
        mse_ref[...] += jnp.sum(mc, axis=-1, keepdims=True)

    if any_mask:
        # Only the tile that crosses the true spatial extent (or a fully
        # out-of-range duplicate tile from the P split) needs the lane mask.
        tile_start = (p * s_inner + s) * tile_s

        @pl.when(tile_start + tile_s > spatial)
        def _():
            lane = jax.lax.broadcasted_iota(jnp.int32, x.shape, 1)
            valid = (tile_start + lane) < spatial
            zero = jnp.zeros_like(x)
            accumulate(jnp.where(valid, inter_c, zero),
                       jnp.where(valid, card_c, zero),
                       jnp.where(valid, mse_c, zero))

        @pl.when(tile_start + tile_s <= spatial)
        def _():
            accumulate(inter_c, card_c, mse_c)
    else:
        accumulate(inter_c, card_c, mse_c)


def reg_dice_and_mse_loss(net_output, target, *, target_block_bytes=None):
    """Pallas implementation of RegDice_and_MSE_loss.forward(net_output, target)."""
    assert net_output.shape == target.shape, "inputs must have identical shapes"
    assert net_output.ndim >= 3, "expect (B, C, *spatial)"

    n_rows = net_output.shape[0] * net_output.shape[1]
    spatial = math.prod(net_output.shape[2:])

    x2 = net_output.reshape(n_rows, spatial)
    y2 = target.reshape(n_rows, spatial)

    itemsize = jnp.dtype(net_output.dtype).itemsize
    # Dtype-aware sublane packing: 8 rows f32, 16 bf16, 32 int8/fp8.
    row_align = max(8, 32 // max(itemsize, 1))

    vmem_cap = _vmem_capacity_bytes()
    if target_block_bytes is None:
        # ~8 MiB per-input blocks on 128-MiB-VMEM parts (v5e/v6e), <=4 MiB on 64-MiB (v7x).
        target_block_bytes = (8 << 20) if vmem_cap >= (128 << 20) else (4 << 20)
    target_elems = max(row_align * 128, target_block_bytes // itemsize)

    # Spatial tile: multiple of 128, whole (rounded) spatial axis if it fits.
    ts = min(_round_up(spatial, 128),
             max(128, (target_elems // row_align) // 128 * 128))
    # Row tile: multiple of row_align, sized to hit ~target_block_bytes per input.
    tr = max(row_align, (target_elems // ts) // row_align * row_align)
    tr = min(tr, _round_up(n_rows, row_align))

    row_tiles = _cdiv(n_rows, tr)
    s_tiles = _cdiv(spatial, ts)

    # v7x megacore: ensure the parallel grid extent is >= 2 when possible by
    # splitting the spatial tiles across a second parallel axis.
    p_extent = 2 if (row_tiles == 1 and s_tiles >= 2) else 1
    s_inner = _cdiv(s_tiles, p_extent)
    needs_clamp = (p_extent * s_inner != s_tiles)
    any_mask = (spatial % ts != 0) or needs_clamp

    grid = (row_tiles, p_extent, s_inner)

    block_bytes = tr * ts * itemsize
    # 2 inputs x 2 pipeline buffers x block + outputs + slack.
    vmem_limit = 4 * block_bytes + (8 << 20)
    vmem_limit = max(32 << 20, min(vmem_limit, max(32 << 20, vmem_cap - (8 << 20))))

    def in_index(i, p, s):
        t = p * s_inner + s
        if needs_clamp:  # duplicate (fully masked) tile instead of an OOB block index
            t = jnp.minimum(t, s_tiles - 1)
        return (i, t)

    out_spec = pl.BlockSpec((None, tr, 1), lambda i, p, s: (p, i, 0))

    kernel = functools.partial(_regdice_mse_kernel, spatial=spatial,
                               tile_s=ts, s_inner=s_inner, any_mask=any_mask)

    out_shape = tuple(jax.ShapeDtypeStruct((p_extent, n_rows, 1), jnp.float32)
                      for _ in range(3))

    inter_p, card_p, mse_p = pl.pallas_call(
        kernel,
        out_shape=out_shape,
        grid_spec=pltpu.PrefetchScalarGridSpec(
            num_scalar_prefetch=0,
            grid=grid,
            in_specs=[
                pl.BlockSpec((tr, ts), in_index),
                pl.BlockSpec((tr, ts), in_index),
            ],
            out_specs=(out_spec, out_spec, out_spec),
        ),
        compiler_params=pltpu.CompilerParams(
            dimension_semantics=("parallel", "parallel", "arbitrary"),
            vmem_limit_bytes=int(vmem_limit),
        ),
    )(x2, y2)

    # Tiny finalization in plain JAX: fold the P partials, divide, take means.
    inter = jnp.sum(inter_p, axis=0)[:, 0]          # (n_rows,)
    card = jnp.sum(card_p, axis=0)[:, 0]            # (n_rows,)
    mse_total = jnp.sum(mse_p)

    dice = jnp.mean(-(2.0 * inter) / jnp.maximum(card, 1e-6))
    mse = mse_total / jnp.float32(n_rows * spatial)
    return dice + mse


def reg_dice_and_mse_loss_ref(net_output, target):
    """Pure-JAX reference mirroring the PyTorch module."""
    x = 1.0 / (1.0 + jnp.exp(-net_output.astype(jnp.float32)))
    y = target.astype(jnp.float32)
    axes = tuple(range(2, x.ndim))
    inter = jnp.sum((1.0 - jnp.abs(y - x)) * jnp.minimum(y, x), axis=axes)
    card = jnp.sum(x + y, axis=axes)
    dice = jnp.mean(-(2.0 * inter) / jnp.maximum(card, 1e-6))
    mse = jnp.mean((x - y) ** 2)
    return dice + mse


if __name__ == "__main__":
    key = jax.random.PRNGKey(0)
    ks = jax.random.split(key, 6)

    # Primary test: NCHW logits + regression targets, like the PyTorch module.
    shape = (2, 4, 16, 16)
    net_output = jax.random.normal(ks[0], shape, dtype=jnp.float32)   # raw logits
    target = jax.random.uniform(ks[1], shape, dtype=jnp.float32)      # targets in [0, 1]
    out = jax.block_until_ready(reg_dice_and_mse_loss(net_output, target))
    ref = reg_dice_and_mse_loss_ref(net_output, target)
    assert jnp.allclose(out, ref, rtol=1e-5, atol=1e-5), (out, ref)

    # Awkward-shape test: boundary blocks (no padding) + in-kernel lane mask.
    shape2 = (2, 3, 7, 9)
    net_output2 = jax.random.normal(ks[2], shape2, dtype=jnp.float32)
    target2 = jax.random.uniform(ks[3], shape2, dtype=jnp.float32)
    out2 = jax.block_until_ready(reg_dice_and_mse_loss(net_output2, target2))
    ref2 = reg_dice_and_mse_loss_ref(net_output2, target2)
    assert jnp.allclose(out2, ref2, rtol=1e-5, atol=1e-5), (out2, ref2)

    # Multi-tile test (tiny forced block size): exercises the P=2 parallel
    # spatial split, the clamped duplicate tile, and multi-step accumulation.
    shape3 = (1, 8, 379)
    net_output3 = jax.random.normal(ks[4], shape3, dtype=jnp.float32)
    target3 = jax.random.uniform(ks[5], shape3, dtype=jnp.float32)
    out3 = jax.block_until_ready(
        reg_dice_and_mse_loss(net_output3, target3, target_block_bytes=4096))
    ref3 = reg_dice_and_mse_loss_ref(net_output3, target3)
    assert jnp.allclose(out3, ref3, rtol=1e-5, atol=1e-5), (out3, ref3)

    print("KERNEL_OK")
</pallas_src>

<mosaic_0001>
module attributes {stable_mosaic.version = 11 : i64} {
  func.func @_regdice_mse_kernel(%arg0: i32, %arg1: i32, %arg2: i32, %arg3: memref<8x256xf32, #tpu.memory_space<vmem>>, %arg4: memref<8x256xf32, #tpu.memory_space<vmem>>, %arg5: memref<1x8x1xf32, #tpu.memory_space<vmem>>, %arg6: memref<1x8x1xf32, #tpu.memory_space<vmem>>, %arg7: memref<1x8x1xf32, #tpu.memory_space<vmem>>) attributes {dimension_semantics = [#tpu.dimension_semantics<parallel>, #tpu.dimension_semantics<parallel>, #tpu.dimension_semantics<arbitrary>], iteration_bounds = array<i64: 1, 1, 1>, scalar_prefetch = 0 : i64, scratch_operands = 0 : i64, tpu.core_type = #tpu.core_type<tc>, window_params = [{transform_indices = @transform_0, window_bounds = array<i64: 8, 256>}, {transform_indices = @transform_1, window_bounds = array<i64: 8, 256>}, {transform_indices = @transform_2, window_bounds = array<i64: 1, 8, 1>}, {transform_indices = @transform_3, window_bounds = array<i64: 1, 8, 1>}, {transform_indices = @transform_4, window_bounds = array<i64: 1, 8, 1>}]} {
    %c0_i32 = arith.constant 0 : i32
    %0 = arith.cmpi eq, %arg2, %c0_i32 : i32
    %1 = arith.extui %0 : i1 to i32
    %c0_i32_0 = arith.constant 0 : i32
    %2 = arith.cmpi ne, %1, %c0_i32_0 : i32
    scf.if %2 {
      %cst_28 = arith.constant 0.000000e+00 : f32
      %44 = vector.broadcast %cst_28 : f32 to vector<8x1xf32>
      %c0_29 = arith.constant 0 : index
      %c0_30 = arith.constant 0 : index
      %c0_31 = arith.constant 0 : index
      %45 = vector.load %arg5[%c0_29, %c0_30, %c0_31] : memref<1x8x1xf32, #tpu.memory_space<vmem>>, vector<1x8x1xf32>
      %46 = vector.shape_cast %45 : vector<1x8x1xf32> to vector<8x1xf32>
      %47 = vector.shape_cast %44 : vector<8x1xf32> to vector<1x8x1xf32>
      tpu.vector_store %arg5[%c0_29, %c0_30, %c0_31], %47 {strides = array<i32>} : memref<1x8x1xf32, #tpu.memory_space<vmem>>, vector<1x8x1xf32>,
      %cst_32 = arith.constant 0.000000e+00 : f32
      %48 = vector.broadcast %cst_32 : f32 to vector<8x1xf32>
      %c0_33 = arith.constant 0 : index
      %c0_34 = arith.constant 0 : index
      %c0_35 = arith.constant 0 : index
      %49 = vector.load %arg6[%c0_33, %c0_34, %c0_35] : memref<1x8x1xf32, #tpu.memory_space<vmem>>, vector<1x8x1xf32>
      %50 = vector.shape_cast %49 : vector<1x8x1xf32> to vector<8x1xf32>
      %51 = vector.shape_cast %48 : vector<8x1xf32> to vector<1x8x1xf32>
      tpu.vector_store %arg6[%c0_33, %c0_34, %c0_35], %51 {strides = array<i32>} : memref<1x8x1xf32, #tpu.memory_space<vmem>>, vector<1x8x1xf32>,
      %cst_36 = arith.constant 0.000000e+00 : f32
      %52 = vector.broadcast %cst_36 : f32 to vector<8x1xf32>
      %c0_37 = arith.constant 0 : index
      %c0_38 = arith.constant 0 : index
      %c0_39 = arith.constant 0 : index
      %53 = vector.load %arg7[%c0_37, %c0_38, %c0_39] : memref<1x8x1xf32, #tpu.memory_space<vmem>>, vector<1x8x1xf32>
      %54 = vector.shape_cast %53 : vector<1x8x1xf32> to vector<8x1xf32>
      %55 = vector.shape_cast %52 : vector<8x1xf32> to vector<1x8x1xf32>
      tpu.vector_store %arg7[%c0_37, %c0_38, %c0_39], %55 {strides = array<i32>} : memref<1x8x1xf32, #tpu.memory_space<vmem>>, vector<1x8x1xf32>,
    } else {
    }
    %c0 = arith.constant 0 : index
    %c0_1 = arith.constant 0 : index
    %3 = vector.load %arg3[%c0, %c0_1] : memref<8x256xf32, #tpu.memory_space<vmem>>, vector<8x256xf32>
    %c0_2 = arith.constant 0 : index
    %c0_3 = arith.constant 0 : index
    %4 = vector.load %arg4[%c0_2, %c0_3] : memref<8x256xf32, #tpu.memory_space<vmem>>, vector<8x256xf32>
    %cst = arith.constant 5.000000e-01 : f32
    %5 = vector.broadcast %cst : f32 to vector<8x256xf32>
    %6 = arith.mulf %5, %3 : vector<8x256xf32>
    %7 = math.tanh %6 : vector<8x256xf32>
    %cst_4 = arith.constant 5.000000e-01 : f32
    %8 = vector.broadcast %cst_4 : f32 to vector<8x256xf32>
    %9 = arith.mulf %8, %7 : vector<8x256xf32>
    %cst_5 = arith.constant 5.000000e-01 : f32
    %10 = vector.broadcast %cst_5 : f32 to vector<8x256xf32>
    %11 = arith.addf %9, %10 : vector<8x256xf32>
    %12 = arith.subf %11, %4 : vector<8x256xf32>
    %13 = math.absf %12 : vector<8x256xf32>
    %cst_6 = arith.constant 1.000000e+00 : f32
    %14 = vector.broadcast %cst_6 : f32 to vector<8x256xf32>
    %15 = arith.subf %14, %13 : vector<8x256xf32>
    %16 = arith.minimumf %4, %11 : vector<8x256xf32>
    %17 = arith.mulf %15, %16 : vector<8x256xf32>
    %18 = arith.addf %11, %4 : vector<8x256xf32>
    %19 = arith.mulf %12, %12 : vector<8x256xf32>
    %c0_7 = arith.constant 0 : index
    %c0_8 = arith.constant 0 : index
    %c0_9 = arith.constant 0 : index
    %20 = vector.load %arg5[%c0_7, %c0_8, %c0_9] : memref<1x8x1xf32, #tpu.memory_space<vmem>>, vector<1x8x1xf32>
    %21 = vector.shape_cast %20 : vector<1x8x1xf32> to vector<8x1xf32>
    %cst_10 = arith.constant dense<0.000000e+00> : vector<8xf32>
    %22 = vector.multi_reduction <add>, %17, %cst_10 [1] : vector<8x256xf32> to vector<8xf32>
    %23 = vector.shape_cast %22 : vector<8xf32> to vector<8x1xf32>
    %24 = arith.addf %21, %23 : vector<8x1xf32>
    %c0_11 = arith.constant 0 : index
    %c0_12 = arith.constant 0 : index
    %c0_13 = arith.constant 0 : index
    %25 = vector.load %arg5[%c0_11, %c0_12, %c0_13] : memref<1x8x1xf32, #tpu.memory_space<vmem>>, vector<1x8x1xf32>
    %26 = vector.shape_cast %25 : vector<1x8x1xf32> to vector<8x1xf32>
    %27 = vector.shape_cast %24 : vector<8x1xf32> to vector<1x8x1xf32>
    tpu.vector_store %arg5[%c0_11, %c0_12, %c0_13], %27 {strides = array<i32>} : memref<1x8x1xf32, #tpu.memory_space<vmem>>, vector<1x8x1xf32>,
    %c0_14 = arith.constant 0 : index
    %c0_15 = arith.constant 0 : index
    %c0_16 = arith.constant 0 : index
    %28 = vector.load %arg6[%c0_14, %c0_15, %c0_16] : memref<1x8x1xf32, #tpu.memory_space<vmem>>, vector<1x8x1xf32>
    %29 = vector.shape_cast %28 : vector<1x8x1xf32> to vector<8x1xf32>
    %cst_17 = arith.constant dense<0.000000e+00> : vector<8xf32>
    %30 = vector.multi_reduction <add>, %18, %cst_17 [1] : vector<8x256xf32> to vector<8xf32>
    %31 = vector.shape_cast %30 : vector<8xf32> to vector<8x1xf32>
    %32 = arith.addf %29, %31 : vector<8x1xf32>
    %c0_18 = arith.constant 0 : index
    %c0_19 = arith.constant 0 : index
    %c0_20 = arith.constant 0 : index
    %33 = vector.load %arg6[%c0_18, %c0_19, %c0_20] : memref<1x8x1xf32, #tpu.memory_space<vmem>>, vector<1x8x1xf32>
    %34 = vector.shape_cast %33 : vector<1x8x1xf32> to vector<8x1xf32>
    %35 = vector.shape_cast %32 : vector<8x1xf32> to vector<1x8x1xf32>
    tpu.vector_store %arg6[%c0_18, %c0_19, %c0_20], %35 {strides = array<i32>} : memref<1x8x1xf32, #tpu.memory_space<vmem>>, vector<1x8x1xf32>,
    %c0_21 = arith.constant 0 : index
    %c0_22 = arith.constant 0 : index
    %c0_23 = arith.constant 0 : index
    %36 = vector.load %arg7[%c0_21, %c0_22, %c0_23] : memref<1x8x1xf32, #tpu.memory_space<vmem>>, vector<1x8x1xf32>
    %37 = vector.shape_cast %36 : vector<1x8x1xf32> to vector<8x1xf32>
    %cst_24 = arith.constant dense<0.000000e+00> : vector<8xf32>
    %38 = vector.multi_reduction <add>, %19, %cst_24 [1] : vector<8x256xf32> to vector<8xf32>
    %39 = vector.shape_cast %38 : vector<8xf32> to vector<8x1xf32>
    %40 = arith.addf %37, %39 : vector<8x1xf32>
    %c0_25 = arith.constant 0 : index
    %c0_26 = arith.constant 0 : index
    %c0_27 = arith.constant 0 : index
    %41 = vector.load %arg7[%c0_25, %c0_26, %c0_27] : memref<1x8x1xf32, #tpu.memory_space<vmem>>, vector<1x8x1xf32>
    %42 = vector.shape_cast %41 : vector<1x8x1xf32> to vector<8x1xf32>
    %43 = vector.shape_cast %40 : vector<8x1xf32> to vector<1x8x1xf32>
    tpu.vector_store %arg7[%c0_25, %c0_26, %c0_27], %43 {strides = array<i32>} : memref<1x8x1xf32, #tpu.memory_space<vmem>>, vector<1x8x1xf32>,
    return
  }
  func.func @transform_0(%arg0: i32, %arg1: i32, %arg2: i32) -> (i32, i32) {
    %c1_i32 = arith.constant 1 : i32
    %0 = arith.muli %arg1, %c1_i32 : i32
    %1 = arith.addi %0, %arg2 : i32
    %c0_i32 = arith.constant 0 : i32
    return %arg0, %1 : i32, i32
  }
  func.func @transform_1(%arg0: i32, %arg1: i32, %arg2: i32) -> (i32, i32) {
    %c1_i32 = arith.constant 1 : i32
    %0 = arith.muli %arg1, %c1_i32 : i32
    %1 = arith.addi %0, %arg2 : i32
    %c0_i32 = arith.constant 0 : i32
    return %arg0, %1 : i32, i32
  }
  func.func @transform_2(%arg0: i32, %arg1: i32, %arg2: i32) -> (i32, i32, i32) {
    %c0_i32 = arith.constant 0 : i32
    %c0_i32_0 = arith.constant 0 : i32
    return %arg1, %arg0, %c0_i32 : i32, i32, i32
  }
  func.func @transform_3(%arg0: i32, %arg1: i32, %arg2: i32) -> (i32, i32, i32) {
    %c0_i32 = arith.constant 0 : i32
    %c0_i32_0 = arith.constant 0 : i32
    return %arg1, %arg0, %c0_i32 : i32, i32, i32
  }
  func.func @transform_4(%arg0: i32, %arg1: i32, %arg2: i32) -> (i32, i32, i32) {
    %c0_i32 = arith.constant 0 : i32
    %c0_i32_0 = arith.constant 0 : i32
    return %arg1, %arg0, %c0_i32 : i32, i32, i32
  }
}

</mosaic_0001>

<llo_original>
// kernel: tpu_custom_call.1
$region0: #{tpu_custom_call.1}
  #allocation0 [shape = 'u32[]', space=smem, size = 0x4, offset = 0x4, fixed_abs, tag = 'smem constant byte address 0x4 - core index']
  #allocation1 [shape = 'u32[144,128]{1,0:T(1,128)}', space=vmem, size = 0x12000, scoped, tag = 'internal scratch']
  %s0 = inlined_call_operand.hbm [shape: f32[8,256], index: 0, kind: input, shape index: {}]
  %s1 = inlined_call_operand.hbm [shape: f32[8,256], index: 1, kind: input, shape index: {}]
  %s2 = inlined_call_operand.vmem [shape: f32[1,8,1], index: 2, kind: output, shape index: {0}]
  %s3 = inlined_call_operand.vmem [shape: f32[1,8,1], index: 3, kind: output, shape index: {1}]
  %s4 = inlined_call_operand.vmem [shape: f32[1,8,1], index: 4, kind: output, shape index: {2}]
  %5 = xla_tuple %s2, %s3, %s4
  %s6 = sld [smem:[#allocation0]]
  $region46: #{tpu_custom_call.1} parent=0
    _
  %s8 = ssub.s32 1, %s6
  %s9 = scalar_select 0, %s8, %s6
  $region1: #{tpu_custom_call.1} parent=0
    #allocation2 [shape = 'u8[8192]{0}', space=vmem, size = 0x2000, scoped, tag = 'input window, operand 0, single buffered']
    #allocation3 [shape = 's32[1]{0}', space=sflag, size = 0x4, scoped, tag = 'scoped memory for tpu_custom_call.1']
    #allocation4 [shape = 'u8[8192]{0}', space=vmem, size = 0x2000, scoped, tag = 'input window, operand 1, single buffered']
    #allocation5 [shape = 's32[1]{0}', space=sflag, size = 0x4, scoped, tag = 'scoped memory for tpu_custom_call.1']
    %10 = vsyncpa [#allocation3], 0
    %11 = vsyncpa [#allocation5], 0
    // Predicated region
    $region2: #{tpu_custom_call.1} parent=1 // pred_check
      _
    $region3: #{tpu_custom_call.1} parent=1 // pred_check_branch
      %13 = sbr.rel (0) target = $region5
    $region4: #{tpu_custom_call.1} parent=1 // pred_region
      %s14 = sadd.s32 0, 0
      %s15 = smul.u32 2, %s14
      %s17 = ssub.s32 256, 256
      %18 = vsyncadd [#allocation3], %s17
      %s19 = smul.addr %s15, 128
      %s20 = scalar_lea.hbm %s0, %s19
      %s22 = sshll.u32 [#allocation2], 4
      %s23 = int_to_ptr.vmem [resolvable:$true] %s22
      %25 = dma.hbm_to_vmem [thread:$0]  %s20, 256, %s23, [#allocation3]
    $region5: #{tpu_custom_call.1} parent=1 // pred_fallthru
      _
    // Predicated region
    $region6: #{tpu_custom_call.1} parent=1 // pred_check
      _
    $region7: #{tpu_custom_call.1} parent=1 // pred_check_branch
      %27 = sbr.rel (0) target = $region9
    $region8: #{tpu_custom_call.1} parent=1 // pred_region
      %s28 = sadd.s32 0, 0
      %s29 = smul.u32 2, %s28
      %s31 = ssub.s32 256, 256
      %32 = vsyncadd [#allocation5], %s31
      %s33 = smul.addr %s29, 128
      %s34 = scalar_lea.hbm %s1, %s33
      %s36 = sshll.u32 [#allocation4], 4
      %s37 = int_to_ptr.vmem [resolvable:$true] %s36
      %39 = dma.hbm_to_vmem [thread:$0]  %s34, 256, %s37, [#allocation5]
    $region9: #{tpu_custom_call.1} parent=1 // pred_fallthru
      _
    // Predicated region
    $region10: #{tpu_custom_call.1} parent=1 // pred_check
      _
    $region11: #{tpu_custom_call.1} parent=1 // pred_check_branch
      %41 = sbr.rel (0) target = $region13
    $region12: #{tpu_custom_call.1} parent=1 // pred_region
      %42 = dma.done [#allocation3], 256
    $region13: #{tpu_custom_call.1} parent=1 // pred_fallthru
      _
    // Predicated region
    $region14: #{tpu_custom_call.1} parent=1 // pred_check
      _
    $region15: #{tpu_custom_call.1} parent=1 // pred_check_branch
      %44 = sbr.rel (0) target = $region17
    $region16: #{tpu_custom_call.1} parent=1 // pred_region
      %45 = dma.done [#allocation5], 256
    $region17: #{tpu_custom_call.1} parent=1 // pred_fallthru
      _
    %s46 = sadd.s32 0, 0
    %s47 = smul.u32 2, %s46
    %s48 = sadd.s32 0, 0
    %s49 = smul.u32 2, %s48
    %p50 = scmp.eq.s32.totalorder 0, 0
    // Predicated region
    $region18: #{tpu_custom_call.1} parent=1 // pred_check
      %p51 = pneg %p50
    $region19: #{tpu_custom_call.1} parent=1 // pred_check_branch
      %53 = sbr.rel (%p51) target = $region21
    $region20: #{tpu_custom_call.1} parent=1 // pred_region
      %vm54 = vcmask 7168
      %55 = vst.msk [vmem:[%s2] sm:$0xff] %vm54, 0.0
      %56 = vst.msk [vmem:[%s3] sm:$0xff] %vm54, 0.0
      %57 = vst.msk [vmem:[%s4] sm:$0xff] %vm54, 0.0
    $region21: #{tpu_custom_call.1} parent=1 // pred_fallthru
      _
    %v58 = vld [vmem:[#allocation2] sm:$0xff]
    %v59 = vld [vmem:[#allocation2 + $0x8] sm:$0xff]
    %v60 = vld [vmem:[#allocation4] sm:$0xff]
    %v61 = vld [vmem:[#allocation4 + $0x8] sm:$0xff]
    %v62 = vmul.f32 %v58, 0.5
    %v63 = vmul.f32 %v59, 0.5
    %v64 = vtanh.pop %v62
    %v65 = vtanh.pop %v63
    %v66 = vmul.f32 %v64, 0.5
    %v67 = vmul.f32 %v65, 0.5
    %v68 = vadd.f32 %v66, 0.5
    %v69 = vadd.f32 %v67, 0.5
    %v70 = vsub.f32 %v68, %v60
    %v71 = vsub.f32 %v69, %v61
    %v72 = vand.u32 2147483647, %v70
    %v73 = vand.u32 2147483647, %v71
    %v74 = vsub.f32 1.0, %v72
    %v75 = vsub.f32 1.0, %v73
    %v76 = vmin.f32 %v60, %v68
    %v77 = vmin.f32 %v61, %v69
    %v78 = vmul.f32 %v74, %v76
    %v79 = vmul.f32 %v75, %v77
    %v80 = vadd.f32 %v68, %v60
    %v81 = vadd.f32 %v69, %v61
    %v82 = vmul.f32 %v70, %v70
    %v83 = vmul.f32 %v71, %v71
    %v84 = vld [vmem:[%s2] sm:$0xff]
    %v85 = vadd.f32 %v78, %v79
    %86 = vadd.xlane.f32.xlu0 %v85
    %v87 = vpop.xlane.xlu0 %86
    %v88 = vadd.f32 %v84, %v87
    %vm89 = vcmask 7168
    %90 = vst.msk [vmem:[%s2] sm:$0xff] %vm89, %v88
    %v91 = vld [vmem:[%s3] sm:$0xff]
    %v92 = vadd.f32 %v80, %v81
    %93 = vadd.xlane.f32.xlu0 %v92
    %v94 = vpop.xlane.xlu0 %93
    %v95 = vadd.f32 %v91, %v94
    %96 = vst.msk [vmem:[%s3] sm:$0xff] %vm89, %v95
    %v97 = vld [vmem:[%s4] sm:$0xff]
    %v98 = vadd.f32 %v82, %v83
    %99 = vadd.xlane.f32.xlu0 %v98
    %v100 = vpop.xlane.xlu0 %99
    %v101 = vadd.f32 %v97, %v100
    %102 = vst.msk [vmem:[%s4] sm:$0xff] %vm89, %v101
    // Predicated region
    $region22: #{tpu_custom_call.1} parent=1 // pred_check
      _
    $region23: #{tpu_custom_call.1} parent=1 // pred_check_branch
      %104 = sbr.rel (0) target = $region25
    $region24: #{tpu_custom_call.1} parent=1 // pred_region
      _
    $region25: #{tpu_custom_call.1} parent=1 // pred_fallthru
      _
    // Predicated region
    $region26: #{tpu_custom_call.1} parent=1 // pred_check
      _
    $region27: #{tpu_custom_call.1} parent=1 // pred_check_branch
      %106 = sbr.rel (0) target = $region29
    $region28: #{tpu_custom_call.1} parent=1 // pred_region
      _
    $region29: #{tpu_custom_call.1} parent=1 // pred_fallthru
      _
    // Predicated region
    $region30: #{tpu_custom_call.1} parent=1 // pred_check
      _
    $region31: #{tpu_custom_call.1} parent=1 // pred_check_branch
      %108 = sbr.rel (0) target = $region33
    $region32: #{tpu_custom_call.1} parent=1 // pred_region
      _
    $region33: #{tpu_custom_call.1} parent=1 // pred_fallthru
      _
    // Predicated region
    $region34: #{tpu_custom_call.1} parent=1 // pred_check
      _
    $region35: #{tpu_custom_call.1} parent=1 // pred_check_branch
      %110 = sbr.rel (0) target = $region37
    $region36: #{tpu_custom_call.1} parent=1 // pred_region
      _
    $region37: #{tpu_custom_call.1} parent=1 // pred_fallthru
      _
    // Predicated region
    $region38: #{tpu_custom_call.1} parent=1 // pred_check
      _
    $region39: #{tpu_custom_call.1} parent=1 // pred_check_branch
      %112 = sbr.rel (0) target = $region41
    $region40: #{tpu_custom_call.1} parent=1 // pred_region
      _
    $region41: #{tpu_custom_call.1} parent=1 // pred_fallthru
      _
    // Predicated region
    $region42: #{tpu_custom_call.1} parent=1 // pred_check
      _
    $region43: #{tpu_custom_call.1} parent=1 // pred_check_branch
      %114 = sbr.rel (0) target = $region45
    $region44: #{tpu_custom_call.1} parent=1 // pred_region
      _
    $region45: #{tpu_custom_call.1} parent=1 // pred_fallthru
      _
    %115 = vsyncpa [#allocation3], 1
    %116 = vsyncpa [#allocation5], 1

</llo_original>
